<compile_context>
chip_gen: v7x
topology: tpu7x:2x2x1
jax: 0.10.0
libtpu: 0.0.40
codegen_flags: <defaults>
</compile_context>

<pallas_src>
import jax
import jax.numpy as jnp
from jax.experimental import pallas as pl
from jax.experimental.pallas import tpu as pltpu

_LANE = 128
_BLOCK_BYTES = 4 << 20      # target bytes per x/out block
_VMEM_LIMIT = 32 << 20      # explicit scoped-VMEM budget (safe on v5e/v6e/v7x)


def _mul_kernel(x_ref, w_ref, o_ref):
    # x_ref: (TB, TL), w_ref: (1, TL) -> leading-dim broadcast, pure VPU multiply.
    o_ref[...] = (x_ref[...] * w_ref[...]).astype(o_ref.dtype)


def _addcmul_kernel(x_ref, w_ref, b_ref, o_ref):
    # out = bias + x * weight   (torch.addcmul semantics, value=1)
    o_ref[...] = (b_ref[...] + x_ref[...] * w_ref[...]).astype(o_ref.dtype)


def _round_down(v, m):
    return (v // m) * m


def _choose_tiling(B, F, itemsize):
    """Pick (TB, TL): batch rows x feature lanes per block on the flat (B, F) view."""
    # dtype-aware sublane packing multiple: 8 (f32), 16 (bf16), 32 (int8/fp8)
    sub = max(8, 32 // max(1, itemsize))
    target = max(sub * _LANE, _BLOCK_BYTES // itemsize)   # elements per x/out block

    # Feature (lane) tile: multiple of 128, or the full F when F < 128.
    if F < _LANE:
        TL = F
    else:
        TL = min(_round_down(F, _LANE),
                 max(_LANE, _round_down(target // min(B, sub), _LANE)))

    # Batch (sublane) tile: fold batch rows when features are small.
    if B <= sub:
        TB = B                                   # block dim == full array dim (legal)
    else:
        TB = min(_round_down(B, sub), max(sub, _round_down(target // TL, sub)))
    return TB, TL


def multiply_forward(x, weight, bias=None):
    """Pallas implementation of Multiply.forward.

    x:      (B, *shape)
    weight: shape == `shape` (broadcast over batch)
    bias:   same shape as weight, or None
    """
    B = x.shape[0]
    feat_shape = x.shape[1:]
    assert tuple(weight.shape) == tuple(feat_shape)
    F = 1
    for d in feat_shape:
        F *= d

    if bias is None:
        out_dtype = jnp.result_type(x.dtype, weight.dtype)
    else:
        assert tuple(bias.shape) == tuple(feat_shape)
        out_dtype = jnp.result_type(x.dtype, weight.dtype, bias.dtype)

    itemsize = max(jnp.dtype(x.dtype).itemsize, jnp.dtype(out_dtype).itemsize)
    TB, TL = _choose_tiling(B, F, itemsize)
    nF = pl.cdiv(F, TL)
    nB = pl.cdiv(B, TB)

    # v7x megacore: ensure >= 2 steps along a parallel axis when splittable.
    if nF * nB == 1 and TL >= 2 * _LANE:
        TL = max(_LANE, _round_down(pl.cdiv(TL, 2), _LANE))
        nF = pl.cdiv(F, TL)

    # Free (contiguous) reshapes only: no padding pass, no output slice.
    ops = [x.reshape(B, F), weight.reshape(1, F)]
    if bias is not None:
        ops.append(bias.reshape(1, F))

    # grid = (feature_tiles, batch_tiles); batch is the innermost axis so the
    # weight/bias block (index depends only on f) is not re-DMA'd per batch step.
    grid = (nF, nB)
    x_spec = pl.BlockSpec((TB, TL), lambda f, b: (b, f))
    w_spec = pl.BlockSpec((1, TL), lambda f, b: (0, f))
    o_spec = pl.BlockSpec((TB, TL), lambda f, b: (b, f))
    in_specs = [x_spec, w_spec] + ([w_spec] if bias is not None else [])
    kernel = _mul_kernel if bias is None else _addcmul_kernel

    isz = lambda a: jnp.dtype(a.dtype).itemsize
    bytes_accessed = (B * F * isz(x) + F * isz(weight)
                      + (F * isz(bias) if bias is not None else 0)
                      + B * F * jnp.dtype(out_dtype).itemsize)
    cost = pl.CostEstimate(
        flops=B * F * (2 if bias is not None else 1),
        transcendentals=0,
        bytes_accessed=bytes_accessed)

    out = pl.pallas_call(
        kernel,
        out_shape=jax.ShapeDtypeStruct((B, F), out_dtype),
        grid_spec=pltpu.PrefetchScalarGridSpec(
            num_scalar_prefetch=0,
            grid=grid,
            in_specs=in_specs,
            out_specs=o_spec,
        ),
        compiler_params=pltpu.CompilerParams(
            dimension_semantics=("parallel", "parallel"),
            vmem_limit_bytes=_VMEM_LIMIT),
        cost_estimate=cost,
    )(*ops)

    return out.reshape(B, *feat_shape)


if __name__ == "__main__":
    key = jax.random.PRNGKey(0)
    kx, kw, kb = jax.random.split(key, 3)

    B, C, H, W = 2, 4, 16, 16
    x = jax.random.normal(kx, (B, C, H, W), dtype=jnp.float32)
    # deterministic uniform(-1, 1) init, matching nn.init.uniform_(-1, 1)
    weight = jax.random.uniform(kw, (C, H, W), dtype=jnp.float32,
                                minval=-1.0, maxval=1.0)
    bias = jax.random.uniform(kb, (C, H, W), dtype=jnp.float32,
                              minval=-1.0, maxval=1.0)

    # bias=False path (module default): out = x * weight
    out_mul = jax.block_until_ready(multiply_forward(x, weight, None))
    ref_mul = x * weight[None]
    assert jnp.allclose(out_mul, ref_mul, atol=1e-6, rtol=1e-6)

    # bias=True path: out = bias + x * weight  (torch.addcmul)
    out_acm = jax.block_until_ready(multiply_forward(x, weight, bias))
    ref_acm = bias[None] + x * weight[None]
    assert jnp.allclose(out_acm, ref_acm, atol=1e-6, rtol=1e-6)

    # Unaligned feature count (F = 5*7*9 = 315): exercises the ragged edge
    # blocks handled by Pallas masking (no wrapper pad / output slice).
    kx2, kw2 = jax.random.split(kx)
    x_u = jax.random.normal(kx2, (3, 5, 7, 9), dtype=jnp.float32)
    w_u = jax.random.uniform(kw2, (5, 7, 9), dtype=jnp.float32,
                             minval=-1.0, maxval=1.0)
    out_u = jax.block_until_ready(multiply_forward(x_u, w_u, None))
    assert jnp.allclose(out_u, x_u * w_u[None], atol=1e-6, rtol=1e-6)

    print("KERNEL_OK")
</pallas_src>

<mosaic_0001>
module attributes {stable_mosaic.version = 11 : i64} {
  func.func @_mul_kernel(%arg0: i32, %arg1: i32, %arg2: memref<2x512xf32, #tpu.memory_space<vmem>>, %arg3: memref<1x512xf32, #tpu.memory_space<vmem>>, %arg4: memref<2x512xf32, #tpu.memory_space<vmem>>) attributes {dimension_semantics = [#tpu.dimension_semantics<parallel>, #tpu.dimension_semantics<parallel>], iteration_bounds = array<i64: 2, 1>, scalar_prefetch = 0 : i64, scratch_operands = 0 : i64, tpu.core_type = #tpu.core_type<tc>, window_params = [{transform_indices = @transform_0, window_bounds = array<i64: 2, 512>}, {transform_indices = @transform_1, window_bounds = array<i64: 1, 512>}, {transform_indices = @transform_2, window_bounds = array<i64: 2, 512>}]} {
    %c0 = arith.constant 0 : index
    %c0_0 = arith.constant 0 : index
    %0 = vector.load %arg2[%c0, %c0_0] : memref<2x512xf32, #tpu.memory_space<vmem>>, vector<2x512xf32>
    %c0_1 = arith.constant 0 : index
    %c0_2 = arith.constant 0 : index
    %1 = vector.load %arg3[%c0_1, %c0_2] : memref<1x512xf32, #tpu.memory_space<vmem>>, vector<1x512xf32>
    %2 = vector.broadcast %1 : vector<1x512xf32> to vector<2x512xf32>
    %3 = arith.mulf %0, %2 : vector<2x512xf32>
    %c0_3 = arith.constant 0 : index
    %c0_4 = arith.constant 0 : index
    %4 = vector.load %arg4[%c0_3, %c0_4] : memref<2x512xf32, #tpu.memory_space<vmem>>, vector<2x512xf32>
    tpu.vector_store %arg4[%c0_3, %c0_4], %3 {strides = array<i32>} : memref<2x512xf32, #tpu.memory_space<vmem>>, vector<2x512xf32>,
    return
  }
  func.func @transform_0(%arg0: i32, %arg1: i32) -> (i32, i32) {
    %c0_i32 = arith.constant 0 : i32
    return %arg1, %arg0 : i32, i32
  }
  func.func @transform_1(%arg0: i32, %arg1: i32) -> (i32, i32) {
    %c0_i32 = arith.constant 0 : i32
    %c0_i32_0 = arith.constant 0 : i32
    return %c0_i32, %arg0 : i32, i32
  }
  func.func @transform_2(%arg0: i32, %arg1: i32) -> (i32, i32) {
    %c0_i32 = arith.constant 0 : i32
    return %arg1, %arg0 : i32, i32
  }
}

</mosaic_0001>

<llo_original>
// kernel: tpu_custom_call.1
$region0: #{tpu_custom_call.1}
  #allocation0 [shape = 'u32[]', space=smem, size = 0x4, offset = 0x4, fixed_abs, tag = 'smem constant byte address 0x4 - core index']
  #allocation1 [shape = 'u32[144,128]{1,0:T(1,128)}', space=vmem, size = 0x12000, scoped, tag = 'internal scratch']
  %s0 = inlined_call_operand.hbm [shape: f32[2,1024], index: 0, kind: input, shape index: {}]
  %s1 = inlined_call_operand.hbm [shape: f32[1,1024], index: 1, kind: input, shape index: {}]
  %s2 = inlined_call_operand.hbm [shape: f32[2,1024], index: 2, kind: output, shape index: {}]
  %s3 = sld [smem:[#allocation0]]
  $region49: #{tpu_custom_call.1} parent=0
    _
  %s5 = ssub.s32 1, %s3
  %s6 = scalar_select 0, %s5, %s3
  $region1: #{tpu_custom_call.1} parent=0
    #allocation2 [shape = 'u8[8192]{0}', space=vmem, size = 0x2000, scoped, tag = 'input window, operand 0']
    #allocation3 [shape = 's32[2]{0}', space=sflag, size = 0x8, scoped, tag = 'scoped memory for tpu_custom_call.1']
    #allocation4 [shape = 's32[2]{0}', space=sflag, size = 0x8, scoped, tag = 'scoped memory for tpu_custom_call.1']
    #allocation5 [shape = 'u8[4096]{0}', space=vmem, size = 0x1000, scoped, tag = 'input window, operand 1']
    #allocation6 [shape = 's32[2]{0}', space=sflag, size = 0x8, scoped, tag = 'scoped memory for tpu_custom_call.1']
    #allocation7 [shape = 'u8[8192]{0}', space=vmem, size = 0x2000, scoped, tag = 'output window, operand 0']
    %7 = vsyncpa [#allocation3], 0
    %s8 = scalar_lea.sflag [#allocation3], 1
    %9 = vsyncpa %s8, 0
    %10 = vsyncpa [#allocation6], 0
    %s11 = scalar_lea.sflag [#allocation6], 1
    %12 = vsyncpa %s11, 0
    %13 = vsyncpa [#allocation4], 0
    %s14 = scalar_lea.sflag [#allocation4], 1
    %15 = vsyncpa %s14, 0
    loop: start=0, step=1, limit=4
    $region2: #{tpu_custom_call.1} parent=1 // loop_pre_header
      _
    $region3: #{tpu_custom_call.1} parent=1 // loop_header
      %s17 = sphi 0, %s21
      %p18 = scmp.ge.s32.totalorder %s17, 4
      %s24 = sphi 0, %s36
      %s25 = sphi 0, %s32
      %s26 = sphi 0, %s24
      %s27 = sphi 0, %s25
      %s28 = sphi 0, %s26
      %s29 = sphi 0, %s27
      %s41 = sphi 0, %s43
      %s44 = sphi 0, %s41
      %s45 = sphi 0, %s44
      %s61 = sphi 0, %s45
      %s67 = sphi 0, %s69
      %s70 = sphi 0, %s67
      %s71 = sphi 0, %s70
      %s87 = sphi 0, %s71
      %s95 = sphi 0, %s97
      %s98 = sphi 0, %s95
      %s99 = sphi 0, %s98
      %s115 = sphi 0, %s99
    $region4: #{tpu_custom_call.1} parent=1 // loop_header_branch
      %20 = sbr.rel (%p18) target = $region8
    $region5: #{tpu_custom_call.1} parent=1 // loop_body
      %s22 = ssub.s32 %s17, 1
      %s23 = ssub.s32 %s17, 2
      %s30 = sadd.s32 1, %s25
      %p31 = scmp.ge.s32.totalorder %s30, 1
      %s32 = scalar_select %p31, 0, %s30
      %s33 = sadd.s32 1, %s24
      %s34 = scalar_select %p31, %s33, %s24
      %p35 = scmp.ge.s32.totalorder %s34, 2
      %s36 = scalar_select %p35, 0, %s34
      %s37 = ssub.s32 %s25, %s32
      %s38 = ssub.s32 %s24, %s36
      %s39 = sor.u32 %s37, %s38
      %p40 = scmp.eq.s32.totalorder %s39, 0
      %s42 = sadd.s32 %s41, 1
      %s43 = scalar_select %p40, %s41, %s42
      %p46 = pneg %p40
      %p47 = scmp.eq.s32.totalorder %s17, 1
      %p48 = por %p46, %p47
      %p49 = scmp.ne.s32.totalorder %s41, %s44
      %p50 = scmp.eq.s32.totalorder %s17, 0
      %p51 = por %p49, %p50
      %p52 = scmp.ne.s32.totalorder %s41, %s44
      %p53 = scmp.eq.s32.totalorder %s22, 1
      %p54 = por %p52, %p53
      %p55 = scmp.ne.s32.totalorder %s44, %s45
      %p56 = scmp.eq.s32.totalorder %s22, 0
      %p57 = por %p55, %p56
      %p58 = scmp.ne.s32.totalorder %s44, %s45
      %p59 = scmp.eq.s32.totalorder %s23, 1
      %p60 = por %p58, %p59
      %p62 = scmp.ne.s32.totalorder %s45, %s61
      %p63 = scmp.eq.s32.totalorder %s23, 0
      %p64 = por %p62, %p63
      %s65 = ssub.s32 %s24, %s36
      %p66 = scmp.eq.s32.totalorder %s65, 0
      %s68 = sadd.s32 %s67, 1
      %s69 = scalar_select %p66, %s67, %s68
      %p72 = pneg %p66
      %p73 = scmp.eq.s32.totalorder %s17, 1
      %p74 = por %p72, %p73
      %p75 = scmp.ne.s32.totalorder %s67, %s70
      %p76 = scmp.eq.s32.totalorder %s17, 0
      %p77 = por %p75, %p76
      %p78 = scmp.ne.s32.totalorder %s67, %s70
      %p79 = scmp.eq.s32.totalorder %s22, 1
      %p80 = por %p78, %p79
      %p81 = scmp.ne.s32.totalorder %s70, %s71
      %p82 = scmp.eq.s32.totalorder %s22, 0
      %p83 = por %p81, %p82
      %p84 = scmp.ne.s32.totalorder %s70, %s71
      %p85 = scmp.eq.s32.totalorder %s23, 1
      %p86 = por %p84, %p85
      %p88 = scmp.ne.s32.totalorder %s71, %s87
      %p89 = scmp.eq.s32.totalorder %s23, 0
      %p90 = por %p88, %p89
      %s91 = ssub.s32 %s25, %s32
      %s92 = ssub.s32 %s24, %s36
      %s93 = sor.u32 %s91, %s92
      %p94 = scmp.eq.s32.totalorder %s93, 0
      %s96 = sadd.s32 %s95, 1
      %s97 = scalar_select %p94, %s95, %s96
      %p100 = pneg %p94
      %p101 = scmp.eq.s32.totalorder %s17, 1
      %p102 = por %p100, %p101
      %p103 = scmp.ne.s32.totalorder %s95, %s98
      %p104 = scmp.eq.s32.totalorder %s17, 0
      %p105 = por %p103, %p104
      %p106 = scmp.ne.s32.totalorder %s95, %s98
      %p107 = scmp.eq.s32.totalorder %s22, 1
      %p108 = por %p106, %p107
      %p109 = scmp.ne.s32.totalorder %s98, %s99
      %p110 = scmp.eq.s32.totalorder %s22, 0
      %p111 = por %p109, %p110
      %p112 = scmp.ne.s32.totalorder %s98, %s99
      %p113 = scmp.eq.s32.totalorder %s23, 1
      %p114 = por %p112, %p113
      %p116 = scmp.ne.s32.totalorder %s99, %s115
      %p117 = scmp.eq.s32.totalorder %s23, 0
      %p118 = por %p116, %p117
      %p119 = scmp.le.s32.totalorder 1, %s17
      %p120 = scmp.lt.s32.totalorder %s17, 3
      %p121 = pnand %p119, %p120
      %p122 = pneg %p121
      // Predicated region
      $region9: #{tpu_custom_call.1} parent=5 // pred_check
        _
      $region10: #{tpu_custom_call.1} parent=5 // pred_check_branch
        %124 = sbr.rel (%p121) target = $region12
      $region11: #{tpu_custom_call.1} parent=5 // pred_region
        %s125 = ssub.s32 %s17, 1
      $region12: #{tpu_custom_call.1} parent=5 // pred_fallthru
        _
      %p126 = scmp.lt.s32.totalorder %s17, 2
      // Predicated region
      $region13: #{tpu_custom_call.1} parent=5 // pred_check
        %p127 = pneg %p126
      $region14: #{tpu_custom_call.1} parent=5 // pred_check_branch
        %129 = sbr.rel (%p127) target = $region16
      $region15: #{tpu_custom_call.1} parent=5 // pred_region
        // Predicated region
        $region17: #{tpu_custom_call.1} parent=15 // pred_check
          %p130 = pneg %p51
        $region18: #{tpu_custom_call.1} parent=15 // pred_check_branch
          %132 = sbr.rel (%p130) target = $region20
        $region19: #{tpu_custom_call.1} parent=15 // pred_region
          %s133 = sand.u32 %s41, 1
          %s134 = scalar_lea.sflag [#allocation3], %s133
          %s135 = sand.u32 %s41, 1
          %s136 = smul.addr %s135, 8
          %s137 = scalar_lea.vmem [#allocation2], %s136
          %s138 = smul.u32 4, %s24
          %s140 = ssub.s32 128, 128
          %141 = vsyncadd %s134, %s140
          %s142 = smul.addr %s25, 8
          %s143 = sadd.s32 %s138, %s142
          %s144 = smul.addr %s143, 32
          %s145 = scalar_lea.hbm %s0, %s144
          %s147 = sshll.u32 %s137, 4
          %s148 = int_to_ptr.vmem [resolvable:$true] %s147
          %150 = dma.hbm_to_vmem [thread:$0]  %s145, 128, %s148, %s134
        $region20: #{tpu_custom_call.1} parent=15 // pred_fallthru
          _
        // Predicated region
        $region21: #{tpu_custom_call.1} parent=15 // pred_check
          %p151 = pneg %p77
        $region22: #{tpu_custom_call.1} parent=15 // pred_check_branch
          %153 = sbr.rel (%p151) target = $region24
        $region23: #{tpu_custom_call.1} parent=15 // pred_region
          %s154 = sand.u32 %s67, 1
          %s155 = scalar_lea.sflag [#allocation6], %s154
          %s156 = sand.u32 %s67, 1
          %s157 = smul.addr %s156, 4
          %s158 = scalar_lea.vmem [#allocation5], %s157
          %s159 = smul.u32 4, %s24
          %s161 = ssub.s32 64, 64
          %162 = vsyncadd %s155, %s161
          %s163 = smul.addr %s159, 16
          %s164 = scalar_lea.hbm %s1, %s163
          %s166 = sshll.u32 %s158, 4
          %s167 = int_to_ptr.vmem [resolvable:$true] %s166
          %169 = dma.hbm_to_vmem [thread:$0]  %s164, 64, %s167, %s155
        $region24: #{tpu_custom_call.1} parent=15 // pred_fallthru
          _
      $region16: #{tpu_custom_call.1} parent=5 // pred_fallthru
        _
      %p170 = scmp.le.s32.totalorder 1, %s17
      %p171 = scmp.lt.s32.totalorder %s17, 3
      %p172 = pnand %p170, %p171
      %p173 = pneg %p172
      // Predicated region
      $region25: #{tpu_custom_call.1} parent=5 // pred_check
        _
      $region26: #{tpu_custom_call.1} parent=5 // pred_check_branch
        %175 = sbr.rel (%p172) target = $region28
      $region27: #{tpu_custom_call.1} parent=5 // pred_region
        %s176 = ssub.s32 %s17, 1
        %s177 = sand.u32 %s44, 1
        %s178 = scalar_lea.sflag [#allocation3], %s177
        %s179 = sand.u32 %s44, 1
        %s180 = smul.addr %s179, 8
        %s181 = scalar_lea.vmem [#allocation2], %s180
        // Predicated region
        $region29: #{tpu_custom_call.1} parent=27 // pred_check
          %p182 = pneg %p57
        $region30: #{tpu_custom_call.1} parent=27 // pred_check_branch
          %184 = sbr.rel (%p182) target = $region32
        $region31: #{tpu_custom_call.1} parent=27 // pred_region
          %185 = dma.done %s178, 128
        $region32: #{tpu_custom_call.1} parent=27 // pred_fallthru
          _
        %s186 = sand.u32 %s70, 1
        %s187 = scalar_lea.sflag [#allocation6], %s186
        %s188 = sand.u32 %s70, 1
        %s189 = smul.addr %s188, 4
        %s190 = scalar_lea.vmem [#allocation5], %s189
        // Predicated region
        $region33: #{tpu_custom_call.1} parent=27 // pred_check
          %p191 = pneg %p83
        $region34: #{tpu_custom_call.1} parent=27 // pred_check_branch
          %193 = sbr.rel (%p191) target = $region36
        $region35: #{tpu_custom_call.1} parent=27 // pred_region
          %194 = dma.done %s187, 64
        $region36: #{tpu_custom_call.1} parent=27 // pred_fallthru
          _
        %s195 = sand.u32 %s44, 1
        %s196 = scalar_lea.sflag [#allocation3], %s195
        %s197 = sand.u32 %s44, 1
        %s198 = smul.addr %s197, 8
        %s199 = scalar_lea.vmem [#allocation2], %s198
        %p200 = pneg %p57
        %p201 = pneg %p54
        %s202 = sand.u32 %s70, 1
        %s203 = scalar_lea.sflag [#allocation6], %s202
        %s204 = sand.u32 %s70, 1
        %s205 = smul.addr %s204, 4
        %s206 = scalar_lea.vmem [#allocation5], %s205
        %p207 = pneg %p83
        %p208 = pneg %p80
        %p209 = pneg %p111
        %p210 = pneg %p108
        %s211 = sand.u32 %s98, 1
        %s212 = scalar_lea.sflag [#allocation4], %s211
        %s213 = sand.u32 %s98, 1
        %s214 = smul.addr %s213, 8
        %s215 = scalar_lea.vmem [#allocation7], %s214
        %s216 = smul.u32 4, %s26
        %s217 = smul.u32 4, %s26
        %s218 = smul.u32 4, %s26
        %v219 = vld [vmem:[%s181] sm:$0xff]
        %v220 = vld [vmem:[%s190] sm:$0xf]
        %v222 = vlaneseq
        %v223 = vshrl.u32 %v222, 7
        %v224 = vsub.s32 0, %v223
        %v225 = vrot.slane %v220, %v224
        %v226 = vlaneseq
        %v227 = vshrl.u32 %v226, 7
        %v228 = vsub.s32 1, %v227
        %v229 = vrot.slane %v220, %v228
        %v230 = vlaneseq
        %v231 = vshrl.u32 %v230, 7
        %v232 = vsub.s32 2, %v231
        %v233 = vrot.slane %v220, %v232
        %v234 = vlaneseq
        %v235 = vshrl.u32 %v234, 7
        %v236 = vsub.s32 3, %v235
        %v237 = vrot.slane %v220, %v236
        %v238 = vcombine.low %v225, %v229
        %v239 = vcombine.low %v233, %v237
        %v241 = vunpack.c.l.s4 1983009808
        %v242 = vunpack.c.0.s8 %v241
        %v243 = vlaneseq
        %v244 = vshrl.u32 %v243, 7
        %v245 = vsub.s32 %v242, %v244
        %v246 = vrot.slane %v238, %v245
        %v248 = vunpack.c.l.s4 1983009808
        %v249 = vunpack.c.0.s8 %v248
        %v250 = vlaneseq
        %v251 = vshrl.u32 %v250, 7
        %v252 = vsub.s32 %v249, %v251
        %v253 = vrot.slane %v239, %v252
        %v254 = vcombine.low %v246, %v253
        %v256 = vmul.f32 %v219, %v254
        %257 = vst [vmem:[%s215] sm:$0xff] %v256
        %s258 = sand.u32 %s98, 1
        %s259 = scalar_lea.sflag [#allocation4], %s258
        %s260 = sand.u32 %s98, 1
        %s261 = smul.addr %s260, 8
        %s262 = scalar_lea.vmem [#allocation7], %s261
        // Predicated region
        $region37: #{tpu_custom_call.1} parent=27 // pred_check
          %p263 = pneg %p108
        $region38: #{tpu_custom_call.1} parent=27 // pred_check_branch
          %265 = sbr.rel (%p263) target = $region40
        $region39: #{tpu_custom_call.1} parent=27 // pred_region
          %s266 = smul.u32 4, %s26
          %s268 = ssub.s32 128, 128
          %269 = vsyncadd %s259, %s268
          %s270 = smul.addr %s27, 8
          %s271 = sadd.s32 %s266, %s270
          %s272 = smul.addr %s271, 32
          %s273 = scalar_lea.hbm %s2, %s272
          %s275 = sshll.u32 %s262, 4
          %s276 = int_to_ptr.vmem [resolvable:$true] %s275
          %278 = dma.vmem_to_hbm [thread:$0]  %s276, 128, %s273, %s259
        $region40: #{tpu_custom_call.1} parent=27 // pred_fallthru
          _
      $region28: #{tpu_custom_call.1} parent=5 // pred_fallthru
        _
      %p279 = scmp.le.s32.totalorder 2, %s17
      // Predicated region
      $region41: #{tpu_custom_call.1} parent=5 // pred_check
        %p280 = pneg %p279
      $region42: #{tpu_custom_call.1} parent=5 // pred_check_branch
        %282 = sbr.rel (%p280) target = $region44
      $region43: #{tpu_custom_call.1} parent=5 // pred_region
        %s283 = ssub.s32 %s17, 2
        // Predicated region
        $region45: #{tpu_custom_call.1} parent=43 // pred_check
          %p284 = pneg %p114
        $region46: #{tpu_custom_call.1} parent=43 // pred_check_branch
          %286 = sbr.rel (%p284) target = $region48
        $region47: #{tpu_custom_call.1} parent=43 // pred_region
          %s287 = sand.u32 %s99, 1
          %s288 = scalar_lea.sflag [#allocation4], %s287
          %s289 = sand.u32 %s99, 1
          %s290 = smul.addr %s289, 8
          %s291 = scalar_lea.vmem [#allocation7], %s290
          %292 = dma.done %s288, 128
        $region48: #{tpu_custom_call.1} parent=43 // pred_fallthru
          _
      $region44: #{tpu_custom_call.1} parent=5 // pred_fallthru
        _
    $region6: #{tpu_custom_call.1} parent=1 // loop_footer
      %s21 = sadd.s32 1, %s17
    $region7: #{tpu_custom_call.1} parent=1 // loop_footer_branch
      %16 = sbr.rel target = $region3
    $region8: #{tpu_custom_call.1} parent=1 // loop_exit
      _
    %293 = vsyncpa [#allocation3], 1
    %s294 = scalar_lea.sflag [#allocation3], 1
    %295 = vsyncpa %s294, 1
    %296 = vsyncpa [#allocation6], 1
    %s297 = scalar_lea.sflag [#allocation6], 1
    %298 = vsyncpa %s297, 1
    %299 = vsyncpa [#allocation4], 1
    %s300 = scalar_lea.sflag [#allocation4], 1
    %301 = vsyncpa %s300, 1

</llo_original>
